<compile_context>
chip_gen: v7x
topology: tpu7x:2x2x1
jax: 0.10.0
libtpu: 0.0.40
codegen_flags: <defaults>
</compile_context>

<pallas_src>
import functools

import jax
import jax.numpy as jnp
from jax import lax
from jax.experimental import pallas as pl
from jax.experimental.pallas import tpu as pltpu


# --------------------------------------------------------------------------- helpers
def _round_up(v, m):
    return (v + m - 1) // m * m


def _vmem_capacity():
    """Physical per-core VMEM, generation-aware (v7x=64 MiB, v5e/v6e=128 MiB)."""
    try:
        return int(pltpu.get_tpu_info().vmem_capacity_bytes)
    except Exception:
        return 64 * 1024 * 1024  # conservative fallback = v7x per-TensorCore VMEM


def _vmem_limit(nbytes, cap):
    """Scoped-VMEM request: what the call needs, never above ~90% of physical."""
    return int(min(int(0.9 * cap), max(nbytes, 16 << 20)))


def _pick_row_tile(n_p, cap=512):
    """Multiple of 128 dividing n_p, <= cap; prefer >= 2 tiles so a 'parallel'
    row axis can be split across v7x's two TensorCores."""
    if n_p <= 128:
        return n_p
    for t in (512, 256, 128):
        if t <= cap and n_p % t == 0 and n_p // t >= 2:
            return t
    return 128


def _pick_col_tile(n_p, cap=2048):
    for t in (2048, 1024, 512, 256, 128):
        if t <= cap and n_p % t == 0:
            return t
    return n_p


# --------------------------------------------------------------------------- kernels
def _h0_kernel(x_ref, w_ref, b_ref, h0_ref):
    """Feature transform h0 = X @ W + b  (dropout=0 / eval -> identity)."""
    h0_ref[...] = (jnp.dot(x_ref[...], w_ref[...],
                           preferred_element_type=jnp.float32) + b_ref[...])


def _prop_fused_kernel(a_hbm_ref, h0_ref, sdc_ref, sdr_ref, out_ref,
                       a_vmem, h_ref, copy_sem):
    """All k VSGC steps in ONE pallas_call, grid=(k,).

    (A+I) (exact 0/1 values, bf16) is copied HBM->VMEM once at t==0 and stays
    resident in a single-buffered scratch, so the dominant n_p^2 operand is read
    from HBM exactly once regardless of k.  Normalization is folded in:
        h_t = c_a * sdr * ((A+I) @ (sdc * h_{t-1})) + c_0 * h0
    with h carried across steps in f32 VMEM scratch."""
    t = pl.program_id(0)

    @pl.when(t == 0)
    def _():
        cp = pltpu.make_async_copy(a_hbm_ref, a_vmem, copy_sem)
        cp.start()
        h_ref[...] = h0_ref[...]          # h_0 = h0; overlaps with the A DMA
        cp.wait()

    tf = (t + 1).astype(jnp.float32)      # step index 1..k
    c0 = 1.0 / (tf + 1.0)
    ca = tf / (tf + 1.0)

    hs = (h_ref[...] * sdc_ref[...]).astype(jnp.bfloat16)   # tiny [n_p, F] pre-scale+cast
    p = jnp.dot(a_vmem[...], hs, preferred_element_type=jnp.float32)
    h_new = ca * (sdr_ref[...] * p) + c0 * h0_ref[...]
    h_ref[...] = h_new                    # intermediate h stays f32

    @pl.when(t == pl.num_programs(0) - 1)
    def _():
        out_ref[...] = h_new


def _prop_stream_kernel(a_ref, hs_ref, h0_ref, sdr_ref, out_ref, acc_ref,
                        *, tk, c_a, c_0, hs_resident):
    """One VSGC step, tiled over rows (parallel) x contraction (arbitrary).

    (A+I) is streamed as int8 (exact) and upcast to bf16 right before the MXU
    (cast hides under the adjacency DMA).  h_{t-1} arrives already pre-scaled by
    sdc and cast to bf16 once per step (in the wrapper)."""
    kk = pl.program_id(1)

    @pl.when(kk == 0)
    def _():
        acc_ref[...] = jnp.zeros_like(acc_ref)

    a_bf16 = a_ref[...].astype(jnp.bfloat16)
    if hs_resident:
        start = pl.multiple_of(kk * tk, 128)
        h_blk = hs_ref[pl.ds(start, tk), :]
    else:
        h_blk = hs_ref[...]
    acc_ref[...] += jnp.dot(a_bf16, h_blk, preferred_element_type=jnp.float32)

    @pl.when(kk == pl.num_programs(1) - 1)
    def _():
        out_ref[...] = c_a * (sdr_ref[...] * acc_ref[...]) + c_0 * h0_ref[...]


# --------------------------------------------------------------------------- wrapper
def vsgc_net_multi_forward(adj, x, w, b, *, k=1,
                           row_tile=None, col_tile=None, force_streaming=False):
    """adj: [N,N] dense adjacency, x: [N,F_in], w: [F_in,F_out], b: [1,F_out]
    -> [N, F_out] float32."""
    n, f_in = x.shape
    f_out = w.shape[1]
    f32 = jnp.float32

    # ---- padding: all trailing dims multiples of 128 (lane-dense, full MXU tiles)
    n_p = _round_up(n, 128)
    f_in_p = _round_up(f_in, 128)
    f_out_p = _round_up(f_out, 128)

    adj_f = adj.astype(f32)
    a_aug = adj_f + jnp.eye(n, dtype=f32)          # (A + I), entries exactly 0/1
    # Degree (incl. self loop) scaling vectors from the *unpadded* adjacency.
    # Padded nodes get scale 1 (finite); padded rows/cols of A are all zero so real
    # rows never read padded junk.  Padded rows of h0 do pick up the bias -> junk
    # that is sliced off at the end (wasted work only, not a correctness leak).
    sdr = jnp.ones((n_p, 1), f32).at[:n, 0].set(lax.rsqrt(jnp.sum(adj_f, axis=1) + 1.0))
    sdc = jnp.ones((n_p, 1), f32).at[:n, 0].set(lax.rsqrt(jnp.sum(adj_f, axis=0) + 1.0))

    x_p = jnp.zeros((n_p, f_in_p), f32).at[:n, :f_in].set(x.astype(f32))
    w_p = jnp.zeros((f_in_p, f_out_p), f32).at[:f_in, :f_out].set(w.astype(f32))
    b_p = jnp.zeros((1, f_out_p), f32).at[:, :f_out].set(b.astype(f32))

    vmem_cap = _vmem_capacity()
    budget = int(0.85 * vmem_cap)

    if row_tile is not None and n_p % row_tile == 0:
        tm = min(row_tile, n_p)
    else:
        tm = _pick_row_tile(n_p)

    # ---- kernel 1: h0 = X @ W + b (row-tiled, parallel) -------------------------
    h0_vmem = (2 * tm * f_in_p * 4 + 2 * f_in_p * f_out_p * 4
               + 2 * (tm + 1) * f_out_p * 4 + (2 << 20))
    h0 = pl.pallas_call(
        _h0_kernel,
        out_shape=jax.ShapeDtypeStruct((n_p, f_out_p), f32),
        grid=(n_p // tm,),
        in_specs=[
            pl.BlockSpec((tm, f_in_p), lambda i: (i, 0)),       # feature row tile
            pl.BlockSpec((f_in_p, f_out_p), lambda i: (0, 0)),  # weights (grid-invariant)
            pl.BlockSpec((1, f_out_p), lambda i: (0, 0)),       # bias
        ],
        out_specs=pl.BlockSpec((tm, f_out_p), lambda i: (i, 0)),
        compiler_params=pltpu.CompilerParams(
            dimension_semantics=("parallel",),
            vmem_limit_bytes=_vmem_limit(h0_vmem, vmem_cap)),
        cost_estimate=pl.CostEstimate(
            flops=2 * n_p * f_in_p * f_out_p, transcendentals=0,
            bytes_accessed=(n_p * f_in_p + f_in_p * f_out_p + n_p * f_out_p) * 4),
    )(x_p, w_p, b_p)

    if k <= 0:
        return h0[:n, :f_out]

    # ---- fused path: (A+I) resident in VMEM, all k steps in one call ------------
    fused_need = n_p * n_p * 2 + 8 * n_p * f_out_p * 4 + (4 << 20)
    if (not force_streaming) and fused_need <= budget:
        a_p = jnp.zeros((n_p, n_p), jnp.bfloat16).at[:n, :n].set(
            a_aug.astype(jnp.bfloat16))                       # exact 0/1 in bf16
        out = pl.pallas_call(
            _prop_fused_kernel,
            out_shape=jax.ShapeDtypeStruct((n_p, f_out_p), f32),
            grid=(k,),
            in_specs=[
                pl.BlockSpec(memory_space=pl.ANY),                 # (A+I) raw HBM ref
                pl.BlockSpec((n_p, f_out_p), lambda t: (0, 0)),    # h0 (grid-invariant)
                pl.BlockSpec((n_p, 1), lambda t: (0, 0)),          # sdc
                pl.BlockSpec((n_p, 1), lambda t: (0, 0)),          # sdr
            ],
            out_specs=pl.BlockSpec((n_p, f_out_p), lambda t: (0, 0)),
            scratch_shapes=[
                pltpu.VMEM((n_p, n_p), jnp.bfloat16),   # resident (A+I), single copy
                pltpu.VMEM((n_p, f_out_p), jnp.float32),  # h carry (f32)
                pltpu.SemaphoreType.DMA(()),
            ],
            compiler_params=pltpu.CompilerParams(
                dimension_semantics=("arbitrary",),      # steps are sequential
                vmem_limit_bytes=_vmem_limit(fused_need, vmem_cap)),
            cost_estimate=pl.CostEstimate(
                flops=k * (2 * n_p * n_p * f_out_p + 6 * n_p * f_out_p),
                transcendentals=0,
                bytes_accessed=n_p * n_p * 2 + 3 * n_p * f_out_p * 4),
        )(a_p, h0, sdc, sdr)
        return out[:n, :f_out]

    # ---- streaming path: rows x contraction tiling, (A+I) streamed as int8 ------
    a_p = jnp.zeros((n_p, n_p), jnp.int8).at[:n, :n].set(a_aug.astype(jnp.int8))
    if col_tile is not None and n_p % col_tile == 0:
        tk = col_tile
    else:
        tk = _pick_col_tile(n_p)

    hs_resident = (2 * n_p * f_out_p * 2) <= budget // 3
    if hs_resident:
        hs_spec = pl.BlockSpec((n_p, f_out_p), lambda i, kk: (0, 0))   # sliced in-kernel
        hs_bytes = 2 * n_p * f_out_p * 2
    else:
        hs_spec = pl.BlockSpec((tk, f_out_p), lambda i, kk: (kk, 0))   # streamed per kk
        hs_bytes = 2 * tk * f_out_p * 2

    stream_need = (2 * tm * tk * 1            # int8 (A+I) tiles, double-buffered
                   + hs_bytes                 # bf16 h_{t-1}
                   + 5 * tm * f_out_p * 4     # h0 + out (double-buffered) + acc scratch
                   + (4 << 20))
    grid = (n_p // tm, n_p // tk)

    h = h0
    for t in range(1, k + 1):
        # Pre-scale by sdc and cast to bf16 ONCE per step (review: no per-grid-iter cast);
        # the f32 h itself is what carries across steps.
        hs = (h * sdc).astype(jnp.bfloat16)
        h = pl.pallas_call(
            functools.partial(_prop_stream_kernel, tk=tk,
                              c_a=t / (t + 1.0), c_0=1.0 / (t + 1.0),
                              hs_resident=hs_resident),
            out_shape=jax.ShapeDtypeStruct((n_p, f_out_p), f32),
            grid=grid,
            in_specs=[
                pl.BlockSpec((tm, tk), lambda i, kk: (i, kk)),        # (A+I) int8 tile
                hs_spec,                                              # sdc-scaled h (bf16)
                pl.BlockSpec((tm, f_out_p), lambda i, kk: (i, 0)),    # h0 row tile
                pl.BlockSpec((tm, 1), lambda i, kk: (i, 0)),          # sdr row tile
            ],
            out_specs=pl.BlockSpec((tm, f_out_p), lambda i, kk: (i, 0)),
            scratch_shapes=[pltpu.VMEM((tm, f_out_p), jnp.float32)],  # f32 accumulator
            compiler_params=pltpu.CompilerParams(
                dimension_semantics=("parallel", "arbitrary"),
                vmem_limit_bytes=_vmem_limit(stream_need, vmem_cap)),
            cost_estimate=pl.CostEstimate(
                flops=2 * n_p * n_p * f_out_p + 6 * n_p * f_out_p,
                transcendentals=0,
                bytes_accessed=n_p * n_p * 1 + n_p * f_out_p * 10),
        )(a_p, hs, h0, sdr)

    return h[:n, :f_out]


# --------------------------------------------------------------------------- reference
def _reference_forward(adj, x, w, b, *, k=1):
    """Pure-JAX f32 reference."""
    a = adj.astype(jnp.float32) + jnp.eye(adj.shape[0], dtype=jnp.float32)
    deg_row = jnp.sum(a, axis=1, keepdims=True)
    deg_col = jnp.sum(a, axis=0, keepdims=True)
    a_hat = a / (jnp.sqrt(deg_row) * jnp.sqrt(deg_col))
    h0 = x.astype(jnp.float32) @ w.astype(jnp.float32) + b
    h = h0
    for t in range(1, k + 1):
        h = (t / (t + 1.0)) * (a_hat @ h) + (1.0 / (t + 1.0)) * h0
    return h


# --------------------------------------------------------------------------- test
if __name__ == "__main__":
    key = jax.random.PRNGKey(0)

    def make_graph(key, n, in_dim, out_dim, p_edge=0.25):
        k_adj, k_x, k_w = jax.random.split(key, 3)
        rand = jax.random.uniform(k_adj, (n, n))
        adj = (rand < p_edge).astype(jnp.float32)
        adj = jnp.maximum(adj, adj.T)                        # symmetric
        adj = adj * (1.0 - jnp.eye(n, dtype=jnp.float32))    # no explicit self loops
        x = jax.random.normal(k_x, (n, in_dim), dtype=jnp.float32)
        w = jax.random.normal(k_w, (in_dim, out_dim), dtype=jnp.float32) / jnp.sqrt(1.0 * in_dim)
        b = jnp.full((1, out_dim), 0.01, dtype=jnp.float32)
        return adj, x, w, b

    # Test 1: small graph -> fused path (VMEM-resident A, all k steps in one call).
    N1, IN1, OUT1, K1 = 32, 16, 16, 3
    adj, x, w, b = make_graph(jax.random.fold_in(key, 1), N1, IN1, OUT1)
    out = jax.block_until_ready(vsgc_net_multi_forward(adj, x, w, b, k=K1))
    ref = _reference_forward(adj, x, w, b, k=K1)
    assert out.shape == (N1, OUT1)
    assert jnp.allclose(out, ref, atol=2e-2, rtol=2e-2), "fused path mismatch vs reference"

    # Test 2: force the streaming path (row x contraction tiling, int8 adjacency).
    N2, IN2, OUT2, K2 = 160, 24, 20, 2
    adj, x, w, b = make_graph(jax.random.fold_in(key, 2), N2, IN2, OUT2)
    out = jax.block_until_ready(
        vsgc_net_multi_forward(adj, x, w, b, k=K2,
                               force_streaming=True, row_tile=128, col_tile=128))
    ref = _reference_forward(adj, x, w, b, k=K2)
    assert out.shape == (N2, OUT2)
    assert jnp.allclose(out, ref, atol=2e-2, rtol=2e-2), "streaming path mismatch vs reference"

    print("KERNEL_OK")
</pallas_src>

<mosaic_0001>
module attributes {stable_mosaic.version = 11 : i64} {
  func.func @_h0_kernel(%arg0: i32, %arg1: memref<128x128xf32, #tpu.memory_space<vmem>>, %arg2: memref<128x128xf32, #tpu.memory_space<vmem>>, %arg3: memref<1x128xf32, #tpu.memory_space<vmem>>, %arg4: memref<128x128xf32, #tpu.memory_space<vmem>>) attributes {dimension_semantics = [#tpu.dimension_semantics<parallel>], iteration_bounds = array<i64: 1>, scalar_prefetch = 0 : i64, scratch_operands = 0 : i64, tpu.core_type = #tpu.core_type<tc>, window_params = [{transform_indices = @transform_0, window_bounds = array<i64: 128, 128>}, {pipeline_mode = #tpu.pipeline_mode<synchronous>, transform_indices = @transform_1, window_bounds = array<i64: 128, 128>}, {pipeline_mode = #tpu.pipeline_mode<synchronous>, transform_indices = @transform_2, window_bounds = array<i64: 1, 128>}, {transform_indices = @transform_3, window_bounds = array<i64: 128, 128>}]} {
    %c0 = arith.constant 0 : index
    %c0_0 = arith.constant 0 : index
    %0 = vector.load %arg1[%c0, %c0_0] : memref<128x128xf32, #tpu.memory_space<vmem>>, vector<128x128xf32>
    %c0_1 = arith.constant 0 : index
    %c0_2 = arith.constant 0 : index
    %1 = vector.load %arg2[%c0_1, %c0_2] : memref<128x128xf32, #tpu.memory_space<vmem>>, vector<128x128xf32>
    %cst = arith.constant dense<0.000000e+00> : vector<128x128xf32>
    %2 = tpu.matmul %0, %1, %cst {dimension_numbers = #tpu.dot_dimension_numbers<[1], [0], [0], [1], [0, 0, 1, 1], [], []>} : vector<128x128xf32>, vector<128x128xf32>, vector<128x128xf32> -> vector<128x128xf32>
    %c0_3 = arith.constant 0 : index
    %c0_4 = arith.constant 0 : index
    %3 = vector.load %arg3[%c0_3, %c0_4] : memref<1x128xf32, #tpu.memory_space<vmem>>, vector<1x128xf32>
    %4 = vector.broadcast %3 : vector<1x128xf32> to vector<128x128xf32>
    %5 = arith.addf %2, %4 : vector<128x128xf32>
    %c0_5 = arith.constant 0 : index
    %c0_6 = arith.constant 0 : index
    %6 = vector.load %arg4[%c0_5, %c0_6] : memref<128x128xf32, #tpu.memory_space<vmem>>, vector<128x128xf32>
    tpu.vector_store %arg4[%c0_5, %c0_6], %5 {strides = array<i32>} : memref<128x128xf32, #tpu.memory_space<vmem>>, vector<128x128xf32>,
    return
  }
  func.func @transform_0(%arg0: i32) -> (i32, i32) {
    %c0_i32 = arith.constant 0 : i32
    %c0_i32_0 = arith.constant 0 : i32
    return %arg0, %c0_i32 : i32, i32
  }
  func.func @transform_1(%arg0: i32) -> (i32, i32) {
    %c0_i32 = arith.constant 0 : i32
    %c0_i32_0 = arith.constant 0 : i32
    %c0_i32_1 = arith.constant 0 : i32
    return %c0_i32, %c0_i32_0 : i32, i32
  }
  func.func @transform_2(%arg0: i32) -> (i32, i32) {
    %c0_i32 = arith.constant 0 : i32
    %c0_i32_0 = arith.constant 0 : i32
    %c0_i32_1 = arith.constant 0 : i32
    return %c0_i32, %c0_i32_0 : i32, i32
  }
  func.func @transform_3(%arg0: i32) -> (i32, i32) {
    %c0_i32 = arith.constant 0 : i32
    %c0_i32_0 = arith.constant 0 : i32
    return %arg0, %c0_i32 : i32, i32
  }
}

</mosaic_0001>

<llo_original>
// kernel: tpu_custom_call.1
$region0: #{tpu_custom_call.1}
  #allocation0 [shape = 'u32[]', space=smem, size = 0x4, offset = 0x4, fixed_abs, tag = 'smem constant byte address 0x4 - core index']
  #allocation1 [shape = 'u32[144,128]{1,0:T(1,128)}', space=vmem, size = 0x12000, scoped, tag = 'internal scratch']
  %s0 = inlined_call_operand.hbm [shape: f32[128,128], index: 0, kind: input, shape index: {}]
  %s1 = inlined_call_operand.hbm [shape: f32[128,128], index: 1, kind: input, shape index: {}]
  %s2 = inlined_call_operand.vmem [shape: f32[1,128], index: 2, kind: input, shape index: {}]
  %s3 = inlined_call_operand.hbm [shape: f32[128,128], index: 3, kind: output, shape index: {}]
  %s4 = sld [smem:[#allocation0]]
  $region30: #{tpu_custom_call.1} parent=0
    _
  %s6 = ssub.s32 1, %s4
  %s7 = scalar_select 0, %s6, %s4
  $region1: #{tpu_custom_call.1} parent=0
    #allocation2 [shape = 'u8[65536]{0}', space=vmem, size = 0x10000, scoped, tag = 'input window, operand 0, single buffered']
    #allocation3 [shape = 's32[1]{0}', space=sflag, size = 0x4, scoped, tag = 'scoped memory for tpu_custom_call.1']
    #allocation4 [shape = 's32[1]{0}', space=sflag, size = 0x4, scoped, tag = 'scoped memory for tpu_custom_call.1']
    #allocation5 [shape = 'u8[65536]{0}', space=vmem, size = 0x10000, scoped, tag = 'input window, operand 1, single buffered']
    #allocation6 [shape = 's32[1]{0}', space=sflag, size = 0x4, scoped, tag = 'scoped memory for tpu_custom_call.1']
    #allocation7 [shape = 'u8[65536]{0}', space=vmem, size = 0x10000, scoped, tag = 'output window, operand 0, single buffered']
    %8 = vsyncpa [#allocation3], 0
    %9 = vsyncpa [#allocation6], 0
    %10 = vsyncpa [#allocation4], 0
    // Predicated region
    $region2: #{tpu_custom_call.1} parent=1 // pred_check
      _
    $region3: #{tpu_custom_call.1} parent=1 // pred_check_branch
      %12 = sbr.rel (0) target = $region5
    $region4: #{tpu_custom_call.1} parent=1 // pred_region
      %s14 = ssub.s32 2048, 2048
      %15 = vsyncadd [#allocation3], %s14
      %s16 = sshll.u32 [#allocation2], 4
      %s17 = int_to_ptr.vmem [resolvable:$true] %s16
      %22 = dma.hbm_to_vmem [thread:$0]  %s0, 2048, %s17, [#allocation3], 128, 128, 8
    $region5: #{tpu_custom_call.1} parent=1 // pred_fallthru
      _
    // Predicated region
    $region6: #{tpu_custom_call.1} parent=1 // pred_check
      _
    $region7: #{tpu_custom_call.1} parent=1 // pred_check_branch
      %24 = sbr.rel (0) target = $region9
    $region8: #{tpu_custom_call.1} parent=1 // pred_region
      %s26 = ssub.s32 2048, 2048
      %27 = vsyncadd [#allocation6], %s26
      %s28 = sshll.u32 [#allocation5], 4
      %s29 = int_to_ptr.vmem [resolvable:$true] %s28
      %34 = dma.hbm_to_vmem [thread:$0]  %s1, 2048, %s29, [#allocation6], 128, 128, 8
    $region9: #{tpu_custom_call.1} parent=1 // pred_fallthru
      _
    // Predicated region
    $region10: #{tpu_custom_call.1} parent=1 // pred_check
      _
    $region11: #{tpu_custom_call.1} parent=1 // pred_check_branch
      %36 = sbr.rel (0) target = $region13
    $region12: #{tpu_custom_call.1} parent=1 // pred_region
      _
    $region13: #{tpu_custom_call.1} parent=1 // pred_fallthru
      _
    // Predicated region
    $region14: #{tpu_custom_call.1} parent=1 // pred_check
      _
    $region15: #{tpu_custom_call.1} parent=1 // pred_check_branch
      %38 = sbr.rel (0) target = $region17
    $region16: #{tpu_custom_call.1} parent=1 // pred_region
      %39 = dma.done [#allocation3], 2048
    $region17: #{tpu_custom_call.1} parent=1 // pred_fallthru
      _
    // Predicated region
    $region18: #{tpu_custom_call.1} parent=1 // pred_check
      _
    $region19: #{tpu_custom_call.1} parent=1 // pred_check_branch
      %41 = sbr.rel (0) target = $region21
    $region20: #{tpu_custom_call.1} parent=1 // pred_region
      %42 = dma.done [#allocation6], 2048
    $region21: #{tpu_custom_call.1} parent=1 // pred_fallthru
      _
    %v43 = vld [vmem:[#allocation2] sm:$0xff]
    %v44 = vld [vmem:[#allocation2 + $0x8] sm:$0xff]
    %v45 = vld [vmem:[#allocation2 + $0x10] sm:$0xff]
    %v46 = vld [vmem:[#allocation2 + $0x18] sm:$0xff]
    %v47 = vld [vmem:[#allocation2 + $0x20] sm:$0xff]
    %v48 = vld [vmem:[#allocation2 + $0x28] sm:$0xff]
    %v49 = vld [vmem:[#allocation2 + $0x30] sm:$0xff]
    %v50 = vld [vmem:[#allocation2 + $0x38] sm:$0xff]
    %v51 = vld [vmem:[#allocation2 + $0x40] sm:$0xff]
    %v52 = vld [vmem:[#allocation2 + $0x48] sm:$0xff]
    %v53 = vld [vmem:[#allocation2 + $0x50] sm:$0xff]
    %v54 = vld [vmem:[#allocation2 + $0x58] sm:$0xff]
    %v55 = vld [vmem:[#allocation2 + $0x60] sm:$0xff]
    %v56 = vld [vmem:[#allocation2 + $0x68] sm:$0xff]
    %v57 = vld [vmem:[#allocation2 + $0x70] sm:$0xff]
    %v58 = vld [vmem:[#allocation2 + $0x78] sm:$0xff]
    %v59 = vld [vmem:[#allocation5] sm:$0xff]
    %v60 = vld [vmem:[#allocation5 + $0x8] sm:$0xff]
    %v61 = vld [vmem:[#allocation5 + $0x10] sm:$0xff]
    %v62 = vld [vmem:[#allocation5 + $0x18] sm:$0xff]
    %v63 = vld [vmem:[#allocation5 + $0x20] sm:$0xff]
    %v64 = vld [vmem:[#allocation5 + $0x28] sm:$0xff]
    %v65 = vld [vmem:[#allocation5 + $0x30] sm:$0xff]
    %v66 = vld [vmem:[#allocation5 + $0x38] sm:$0xff]
    %v67 = vld [vmem:[#allocation5 + $0x40] sm:$0xff]
    %v68 = vld [vmem:[#allocation5 + $0x48] sm:$0xff]
    %v69 = vld [vmem:[#allocation5 + $0x50] sm:$0xff]
    %v70 = vld [vmem:[#allocation5 + $0x58] sm:$0xff]
    %v71 = vld [vmem:[#allocation5 + $0x60] sm:$0xff]
    %v72 = vld [vmem:[#allocation5 + $0x68] sm:$0xff]
    %v73 = vld [vmem:[#allocation5 + $0x70] sm:$0xff]
    %v74 = vld [vmem:[#allocation5 + $0x78] sm:$0xff]
    %v75 = vld [vmem:[%s2] sm:$0x1]
    %v77 = vlaneseq
    %v78 = vshrl.u32 %v77, 7
    %v79 = vsub.s32 0, %v78
    %v80 = vrot.slane %v75, %v79
    %82 = vmatprep.subr.mxu0 0.0
    %83 = vmatpush1.msra.mxu0 %v59
    %84 = vmatprep.subr.mxu0 0.0
    %85 = vmatpush1.msra.mxu0 %v60
    %86 = vmatprep.subr.mxu0 0.0
    %87 = vmatpush1.msra.mxu0 %v61
    %88 = vmatprep.subr.mxu0 0.0
    %89 = vmatpush1.msra.mxu0 %v62
    %90 = vmatprep.subr.mxu0 0.0
    %91 = vmatpush1.msra.mxu0 %v63
    %92 = vmatprep.subr.mxu0 0.0
    %93 = vmatpush1.msra.mxu0 %v64
    %94 = vmatprep.subr.mxu0 0.0
    %95 = vmatpush1.msra.mxu0 %v65
    %96 = vmatprep.subr.mxu0 0.0
    %97 = vmatpush1.msra.mxu0 %v66
    %98 = vmatprep.subr.mxu0 0.0
    %99 = vmatpush1.msra.mxu0 %v67
    %100 = vmatprep.subr.mxu0 0.0
    %101 = vmatpush1.msra.mxu0 %v68
    %102 = vmatprep.subr.mxu0 0.0
    %103 = vmatpush1.msra.mxu0 %v69
    %104 = vmatprep.subr.mxu0 0.0
    %105 = vmatpush1.msra.mxu0 %v70
    %106 = vmatprep.subr.mxu0 0.0
    %107 = vmatpush1.msra.mxu0 %v71
    %108 = vmatprep.subr.mxu0 0.0
    %109 = vmatpush1.msra.mxu0 %v72
    %110 = vmatprep.subr.mxu0 0.0
    %111 = vmatpush1.msra.mxu0 %v73
    %112 = vmatprep.subr.mxu0 0.0
    %113 = vmatpush1.msra.mxu0 %v74
    %114 = vmatprep.subr.mxu0 0.0
    %115 = vmatpush1.msra.mxu0 0.0
    %116 = vmatprep.subr.mxu0 0.0
    %117 = vmatpush1.msra.mxu0 0.0
    %118 = vmatprep.subr.mxu0 0.0
    %119 = vmatpush1.msra.mxu0 0.0
    %120 = vmatprep.subr.mxu0 0.0
    %121 = vmatpush1.msra.mxu0 0.0
    %122 = vmatprep.subr.mxu0 0.0
    %123 = vmatpush1.msra.mxu0 0.0
    %124 = vmatprep.subr.mxu0 0.0
    %125 = vmatpush1.msra.mxu0 0.0
    %126 = vmatprep.subr.mxu0 0.0
    %127 = vmatpush1.msra.mxu0 0.0
    %128 = vmatprep.subr.mxu0 0.0
    %129 = vmatpush1.msra.mxu0 0.0
    %130 = vmatprep.subr.mxu0 0.0
    %131 = vmatpush1.msra.mxu0 0.0
    %132 = vmatprep.subr.mxu0 0.0
    %133 = vmatpush1.msra.mxu0 0.0
    %134 = vmatprep.subr.mxu0 0.0
    %135 = vmatpush1.msra.mxu0 0.0
    %136 = vmatprep.subr.mxu0 0.0
    %137 = vmatpush1.msra.mxu0 0.0
    %138 = vmatprep.subr.mxu0 0.0
    %139 = vmatpush1.msra.mxu0 0.0
    %140 = vmatprep.subr.mxu0 0.0
    %141 = vmatpush1.msra.mxu0 0.0
    %142 = vmatprep.subr.mxu0 0.0
    %143 = vmatpush1.msra.mxu0 0.0
    %144 = vmatprep.subr.mxu0 0.0
    %145 = vmatpush1.msra.mxu0 0.0
    %146 = vmatprep.mubr.f32.mxu0 0.0
    %147 = vmatmul.mubr.f32.gmra.mrb[0].mxu0 %v43
    %v148 = vpop.f32.mrb[0].mxu0
    %v149 = vadd.f32 %v80, %v148
    %v150 = vpop.f32.mrb[0].mxu0
    %151 = vmatprep.mubr.f32.mxu0 0.0
    %152 = vmatmul.mubr.f32.gmra.mrb[0].mxu0 %v44
    %v153 = vpop.f32.mrb[0].mxu0
    %v154 = vadd.f32 %v80, %v153
    %v155 = vpop.f32.mrb[0].mxu0
    %156 = vmatprep.mubr.f32.mxu0 0.0
    %157 = vmatmul.mubr.f32.gmra.mrb[0].mxu0 %v45
    %v158 = vpop.f32.mrb[0].mxu0
    %v159 = vadd.f32 %v80, %v158
    %v160 = vpop.f32.mrb[0].mxu0
    %161 = vmatprep.mubr.f32.mxu0 0.0
    %162 = vmatmul.mubr.f32.gmra.mrb[0].mxu0 %v46
    %v163 = vpop.f32.mrb[0].mxu0
    %v164 = vadd.f32 %v80, %v163
    %v165 = vpop.f32.mrb[0].mxu0
    %166 = vmatprep.mubr.f32.mxu0 0.0
    %167 = vmatmul.mubr.f32.gmra.mrb[0].mxu0 %v47
    %v168 = vpop.f32.mrb[0].mxu0
    %v169 = vadd.f32 %v80, %v168
    %v170 = vpop.f32.mrb[0].mxu0
    %171 = vmatprep.mubr.f32.mxu0 0.0
    %172 = vmatmul.mubr.f32.gmra.mrb[0].mxu0 %v48
    %v173 = vpop.f32.mrb[0].mxu0
    %v174 = vadd.f32 %v80, %v173
    %v175 = vpop.f32.mrb[0].mxu0
    %176 = vmatprep.mubr.f32.mxu0 0.0
    %177 = vmatmul.mubr.f32.gmra.mrb[0].mxu0 %v49
    %v178 = vpop.f32.mrb[0].mxu0
    %v179 = vadd.f32 %v80, %v178
    %v180 = vpop.f32.mrb[0].mxu0
    %181 = vmatprep.mubr.f32.mxu0 0.0
    %182 = vmatmul.mubr.f32.gmra.mrb[0].mxu0 %v50
    %v183 = vpop.f32.mrb[0].mxu0
    %v184 = vadd.f32 %v80, %v183
    %v185 = vpop.f32.mrb[0].mxu0
    %186 = vmatprep.mubr.f32.mxu0 0.0
    %187 = vmatmul.mubr.f32.gmra.mrb[0].mxu0 %v51
    %v188 = vpop.f32.mrb[0].mxu0
    %v189 = vadd.f32 %v80, %v188
    %v190 = vpop.f32.mrb[0].mxu0
    %191 = vmatprep.mubr.f32.mxu0 0.0
    %192 = vmatmul.mubr.f32.gmra.mrb[0].mxu0 %v52
    %v193 = vpop.f32.mrb[0].mxu0
    %v194 = vadd.f32 %v80, %v193
    %v195 = vpop.f32.mrb[0].mxu0
    %196 = vmatprep.mubr.f32.mxu0 0.0
    %197 = vmatmul.mubr.f32.gmra.mrb[0].mxu0 %v53
    %v198 = vpop.f32.mrb[0].mxu0
    %v199 = vadd.f32 %v80, %v198
    %v200 = vpop.f32.mrb[0].mxu0
    %201 = vmatprep.mubr.f32.mxu0 0.0
    %202 = vmatmul.mubr.f32.gmra.mrb[0].mxu0 %v54
    %v203 = vpop.f32.mrb[0].mxu0
    %v204 = vadd.f32 %v80, %v203
    %v205 = vpop.f32.mrb[0].mxu0
    %206 = vmatprep.mubr.f32.mxu0 0.0
    %207 = vmatmul.mubr.f32.gmra.mrb[0].mxu0 %v55
    %v208 = vpop.f32.mrb[0].mxu0
    %v209 = vadd.f32 %v80, %v208
    %v210 = vpop.f32.mrb[0].mxu0
    %211 = vmatprep.mubr.f32.mxu0 0.0
    %212 = vmatmul.mubr.f32.gmra.mrb[0].mxu0 %v56
    %v213 = vpop.f32.mrb[0].mxu0
    %v214 = vadd.f32 %v80, %v213
    %v215 = vpop.f32.mrb[0].mxu0
    %216 = vmatprep.mubr.f32.mxu0 0.0
    %217 = vmatmul.mubr.f32.gmra.mrb[0].mxu0 %v57
    %v218 = vpop.f32.mrb[0].mxu0
    %v219 = vadd.f32 %v80, %v218
    %v220 = vpop.f32.mrb[0].mxu0
    %221 = vmatprep.mubr.f32.mxu0 0.0
    %222 = vmatmul.mubr.f32.gmra.mrb[0].mxu0 %v58
    %v223 = vpop.f32.mrb[0].mxu0
    %v224 = vadd.f32 %v80, %v223
    %v225 = vpop.f32.mrb[0].mxu0
    %226 = vdwg.mxu0
    %227 = vst [vmem:[#allocation7] sm:$0xff] %v149
    %228 = vst [vmem:[#allocation7 + $0x8] sm:$0xff] %v154
    %229 = vst [vmem:[#allocation7 + $0x10] sm:$0xff] %v159
    %230 = vst [vmem:[#allocation7 + $0x18] sm:$0xff] %v164
    %231 = vst [vmem:[#allocation7 + $0x20] sm:$0xff] %v169
    %232 = vst [vmem:[#allocation7 + $0x28] sm:$0xff] %v174
    %233 = vst [vmem:[#allocation7 + $0x30] sm:$0xff] %v179
    %234 = vst [vmem:[#allocation7 + $0x38] sm:$0xff] %v184
    %235 = vst [vmem:[#allocation7 + $0x40] sm:$0xff] %v189
    %236 = vst [vmem:[#allocation7 + $0x48] sm:$0xff] %v194
    %237 = vst [vmem:[#allocation7 + $0x50] sm:$0xff] %v199
    %238 = vst [vmem:[#allocation7 + $0x58] sm:$0xff] %v204
    %239 = vst [vmem:[#allocation7 + $0x60] sm:$0xff] %v209
    %240 = vst [vmem:[#allocation7 + $0x68] sm:$0xff] %v214
    %241 = vst [vmem:[#allocation7 + $0x70] sm:$0xff] %v219
    %242 = vst [vmem:[#allocation7 + $0x78] sm:$0xff] %v224
    // Predicated region
    $region22: #{tpu_custom_call.1} parent=1 // pred_check
      _
    $region23: #{tpu_custom_call.1} parent=1 // pred_check_branch
      %244 = sbr.rel (0) target = $region25
    $region24: #{tpu_custom_call.1} parent=1 // pred_region
      %s246 = ssub.s32 2048, 2048
      %247 = vsyncadd [#allocation4], %s246
      %s248 = sshll.u32 [#allocation7], 4
      %s249 = int_to_ptr.vmem [resolvable:$true] %s248
      %254 = dma.vmem_to_hbm [thread:$0]  %s249, 2048, %s3, [#allocation4], 128, 128, 8
    $region25: #{tpu_custom_call.1} parent=1 // pred_fallthru
      _
    // Predicated region
    $region26: #{tpu_custom_call.1} parent=1 // pred_check
      _
    $region27: #{tpu_custom_call.1} parent=1 // pred_check_branch
      %256 = sbr.rel (0) target = $region29
    $region28: #{tpu_custom_call.1} parent=1 // pred_region
      %257 = dma.done [#allocation4], 2048
    $region29: #{tpu_custom_call.1} parent=1 // pred_fallthru
      _
    %258 = vsyncpa [#allocation3], 1
    %259 = vsyncpa [#allocation6], 1
    %260 = vsyncpa [#allocation4], 1

</llo_original>
